<compile_context>
chip_gen: v7x
topology: tpu7x:2x2x1
jax: 0.10.0
libtpu: 0.0.40
codegen_flags: <defaults>
</compile_context>

<pallas_src>
import jax
import jax.numpy as jnp
from jax.experimental import pallas as pl
from jax.experimental.pallas import tpu as pltpu

_LANES = 512    # lane-dense last dim (multiple of 128)
_TILE_R = 512   # 512 x 512 f32 block = 1 MiB; ~4 MiB double-buffered in+out


def _sigmoid_kernel(x_ref, o_ref):
    # predict(): elementwise sigmoid. exp/reciprocal go to the EUP slot.
    x = x_ref[...].astype(jnp.float32)
    o_ref[...] = jax.nn.sigmoid(x).astype(o_ref.dtype)


def _sigmoid_pallas(x):
    """Elementwise sigmoid over an arbitrary-shape array via a tiled Pallas kernel."""
    orig_shape = x.shape
    orig_dtype = x.dtype
    n = x.size

    flat = x.reshape(-1)

    # Pad the flat vector so it reshapes into a lane-dense (rows, _LANES) slab.
    padded_n = pl.cdiv(n, _LANES) * _LANES
    if padded_n != n:
        flat = jnp.pad(flat, (0, padded_n - n))
    rows = padded_n // _LANES

    if rows <= _TILE_R:
        # Single block equal to the full array dims (satisfies the (8,128)
        # rule even when rows is small / not a multiple of 8).
        block_r = rows
        grid_r = 1
    else:
        # Tile the rows; pad so the grid divides evenly (keeps every store a
        # full unmasked vst and avoids ragged last blocks).
        padded_rows = pl.cdiv(rows, _TILE_R) * _TILE_R
        if padded_rows != rows:
            flat = jnp.pad(flat, (0, (padded_rows - rows) * _LANES))
        rows = padded_rows
        block_r = _TILE_R
        grid_r = rows // _TILE_R

    x2d = flat.reshape(rows, _LANES)

    out2d = pl.pallas_call(
        _sigmoid_kernel,
        out_shape=jax.ShapeDtypeStruct((rows, _LANES), orig_dtype),
        grid=(grid_r,),
        in_specs=[pl.BlockSpec((block_r, _LANES), lambda i: (i, 0))],
        out_specs=pl.BlockSpec((block_r, _LANES), lambda i: (i, 0)),
        compiler_params=pltpu.CompilerParams(
            dimension_semantics=("parallel",)),
    )(x2d)

    return out2d.reshape(-1)[:n].reshape(orig_shape)


class TrascriptionModel:
    """JAX/Pallas equivalent of the PyTorch base TrascriptionModel."""

    def init_weights(self):
        # Base class has no Conv2d / Linear / BatchNorm2d submodules,
        # so weight init is a no-op.
        return self

    def forward(self, x):
        # Identity: no kernel, no HBM traffic.
        return x

    def predict(self, x):
        return _sigmoid_pallas(self.forward(x))

    def __call__(self, x):
        return self.forward(x)


if __name__ == "__main__":
    key = jax.random.PRNGKey(0)

    # Small NCHW feature: batch=2, channels=4, spatial=16x16 -> 2048 elems.
    x = jax.random.normal(key, (2, 4, 16, 16), dtype=jnp.float32)

    model = TrascriptionModel().init_weights()

    logits = model.forward(x)
    probs = model.predict(x)
    jax.block_until_ready(logits)
    jax.block_until_ready(probs)

    # Semantics checks vs. reference.
    assert logits.shape == x.shape and logits.dtype == x.dtype
    assert jnp.allclose(logits, x), "forward must be identity"
    ref_probs = jax.nn.sigmoid(x)
    assert jnp.allclose(probs, ref_probs, atol=1e-6), "predict must be sigmoid(x)"

    # Odd-sized input (not a multiple of the lane width) exercises the pad path.
    x_odd = jax.random.normal(jax.random.PRNGKey(1), (3, 5, 7, 11), dtype=jnp.float32)
    probs_odd = model.predict(x_odd)
    jax.block_until_ready(probs_odd)
    assert probs_odd.shape == x_odd.shape
    assert jnp.allclose(probs_odd, jax.nn.sigmoid(x_odd), atol=1e-6)

    print("KERNEL_OK")
</pallas_src>

<mosaic_0001>
module attributes {stable_mosaic.version = 11 : i64} {
  func.func @_sigmoid_kernel(%arg0: i32, %arg1: memref<4x512xf32, #tpu.memory_space<vmem>>, %arg2: memref<4x512xf32, #tpu.memory_space<vmem>>) attributes {dimension_semantics = [#tpu.dimension_semantics<parallel>], iteration_bounds = array<i64: 1>, scalar_prefetch = 0 : i64, scratch_operands = 0 : i64, tpu.core_type = #tpu.core_type<tc>, window_params = [{transform_indices = @transform_0, window_bounds = array<i64: 4, 512>}, {transform_indices = @transform_1, window_bounds = array<i64: 4, 512>}]} {
    %c0 = arith.constant 0 : index
    %c0_0 = arith.constant 0 : index
    %0 = vector.load %arg1[%c0, %c0_0] : memref<4x512xf32, #tpu.memory_space<vmem>>, vector<4x512xf32>
    %1 = arith.negf %0 : vector<4x512xf32>
    %2 = math.exp %1 : vector<4x512xf32>
    %cst = arith.constant 1.000000e+00 : f32
    %3 = vector.broadcast %cst : f32 to vector<4x512xf32>
    %4 = arith.addf %3, %2 : vector<4x512xf32>
    %5 = arith.divf %3, %4 : vector<4x512xf32>
    %c0_1 = arith.constant 0 : index
    %c0_2 = arith.constant 0 : index
    %6 = vector.load %arg2[%c0_1, %c0_2] : memref<4x512xf32, #tpu.memory_space<vmem>>, vector<4x512xf32>
    tpu.vector_store %arg2[%c0_1, %c0_2], %5 {strides = array<i32>} : memref<4x512xf32, #tpu.memory_space<vmem>>, vector<4x512xf32>,
    return
  }
  func.func @transform_0(%arg0: i32) -> (i32, i32) {
    %c0_i32 = arith.constant 0 : i32
    %c0_i32_0 = arith.constant 0 : i32
    return %arg0, %c0_i32 : i32, i32
  }
  func.func @transform_1(%arg0: i32) -> (i32, i32) {
    %c0_i32 = arith.constant 0 : i32
    %c0_i32_0 = arith.constant 0 : i32
    return %arg0, %c0_i32 : i32, i32
  }
}

</mosaic_0001>

<llo_original>
// kernel: tpu_custom_call.1
$region0: #{tpu_custom_call.1}
  #allocation0 [shape = 'u32[]', space=smem, size = 0x4, offset = 0x4, fixed_abs, tag = 'smem constant byte address 0x4 - core index']
  #allocation1 [shape = 'u32[144,128]{1,0:T(1,128)}', space=vmem, size = 0x12000, scoped, tag = 'internal scratch']
  %s0 = inlined_call_operand.hbm [shape: f32[4,512], index: 0, kind: input, shape index: {}]
  %s1 = inlined_call_operand.hbm [shape: f32[4,512], index: 1, kind: output, shape index: {}]
  %s2 = sld [smem:[#allocation0]]
  $region18: #{tpu_custom_call.1} parent=0
    _
  %s4 = ssub.s32 1, %s2
  %s5 = scalar_select 0, %s4, %s2
  $region1: #{tpu_custom_call.1} parent=0
    #allocation2 [shape = 'u8[8192]{0}', space=vmem, size = 0x2000, scoped, tag = 'input window, operand 0, single buffered']
    #allocation3 [shape = 's32[1]{0}', space=sflag, size = 0x4, scoped, tag = 'scoped memory for tpu_custom_call.1']
    #allocation4 [shape = 's32[1]{0}', space=sflag, size = 0x4, scoped, tag = 'scoped memory for tpu_custom_call.1']
    #allocation5 [shape = 'u8[8192]{0}', space=vmem, size = 0x2000, scoped, tag = 'output window, operand 0, single buffered']
    %6 = vsyncpa [#allocation3], 0
    %7 = vsyncpa [#allocation4], 0
    // Predicated region
    $region2: #{tpu_custom_call.1} parent=1 // pred_check
      _
    $region3: #{tpu_custom_call.1} parent=1 // pred_check_branch
      %9 = sbr.rel (0) target = $region5
    $region4: #{tpu_custom_call.1} parent=1 // pred_region
      %s11 = ssub.s32 256, 256
      %12 = vsyncadd [#allocation3], %s11
      %s14 = sshll.u32 [#allocation2], 4
      %s15 = int_to_ptr.vmem [resolvable:$true] %s14
      %17 = dma.hbm_to_vmem [thread:$0]  %s0, 256, %s15, [#allocation3]
    $region5: #{tpu_custom_call.1} parent=1 // pred_fallthru
      _
    // Predicated region
    $region6: #{tpu_custom_call.1} parent=1 // pred_check
      _
    $region7: #{tpu_custom_call.1} parent=1 // pred_check_branch
      %19 = sbr.rel (0) target = $region9
    $region8: #{tpu_custom_call.1} parent=1 // pred_region
      %20 = dma.done [#allocation3], 256
    $region9: #{tpu_custom_call.1} parent=1 // pred_fallthru
      _
    %v21 = vld [vmem:[#allocation2] sm:$0xff]
    %v22 = vld [vmem:[#allocation2 + $0x8] sm:$0xff]
    %v23 = vxor.u32 %v21, 2147483648
    %v24 = vxor.u32 %v22, 2147483648
    %v25 = vmul.f32 %v23, 1.442695
    %v26 = vpow.pop %v25
    %v27 = vmul.f32 %v24, 1.442695
    %v28 = vpow.pop %v27
    %v29 = vadd.f32 %v26, 1.0
    %v30 = vadd.f32 %v28, 1.0
    %v31 = vrcp.pop %v29
    %v32 = vmul.f32 1.0, %v31
    %v33 = vrcp.pop %v30
    %v34 = vmul.f32 1.0, %v33
    %35 = vst [vmem:[#allocation5] sm:$0xff] %v32
    %36 = vst [vmem:[#allocation5 + $0x8] sm:$0xff] %v34
    // Predicated region
    $region10: #{tpu_custom_call.1} parent=1 // pred_check
      _
    $region11: #{tpu_custom_call.1} parent=1 // pred_check_branch
      %38 = sbr.rel (0) target = $region13
    $region12: #{tpu_custom_call.1} parent=1 // pred_region
      %s40 = ssub.s32 256, 256
      %41 = vsyncadd [#allocation4], %s40
      %s43 = sshll.u32 [#allocation5], 4
      %s44 = int_to_ptr.vmem [resolvable:$true] %s43
      %46 = dma.vmem_to_hbm [thread:$0]  %s44, 256, %s1, [#allocation4]
    $region13: #{tpu_custom_call.1} parent=1 // pred_fallthru
      _
    // Predicated region
    $region14: #{tpu_custom_call.1} parent=1 // pred_check
      _
    $region15: #{tpu_custom_call.1} parent=1 // pred_check_branch
      %48 = sbr.rel (0) target = $region17
    $region16: #{tpu_custom_call.1} parent=1 // pred_region
      %49 = dma.done [#allocation4], 256
    $region17: #{tpu_custom_call.1} parent=1 // pred_fallthru
      _
    %50 = vsyncpa [#allocation3], 1
    %51 = vsyncpa [#allocation4], 1

</llo_original>
